<compile_context>
chip_gen: v6e
topology: v6e:2x2x1
jax: 0.10.0
libtpu: 0.0.40
codegen_flags: <defaults>
</compile_context>

<pallas_src>
import jax
import jax.numpy as jnp
import numpy as np
from jax.experimental import pallas as pl
from jax.experimental.pallas import tpu as pltpu


def _gemm_bias_kernel(p_ref, w_ref, b_ref, o_ref):
    # (tm, K) @ (K, E) on the MXU with f32 accumulation, + (1, E) bias, store.
    y = jnp.dot(p_ref[...], w_ref[...], preferred_element_type=jnp.float32)
    o_ref[...] = (y + b_ref[...]).astype(o_ref.dtype)


def _round_up(v, m):
    return ((v + m - 1) // m) * m


def _block_spec(shape, index_map, pipeline_mode=None):
    if pipeline_mode is None:
        return pl.BlockSpec(shape, index_map)
    return pl.BlockSpec(shape, index_map, pipeline_mode=pipeline_mode)


def overlap_patch_embed(x, conv_w, conv_b, bn_gamma, bn_beta, bn_mean, bn_var,
                        *, stride=4, eps=1e-5,
                        compute_dtype=jnp.bfloat16, out_dtype=None,
                        channels_last=False,
                        patch_pipeline_mode=None, weight_pipeline_mode=None):
    """x: (N, C_in, H, W); conv_w: (E, C_in, KH, KW); conv_b/bn_*: (E,).

    Returns (y, Ho, Wo); y is NCHW (module parity) or (N, Ho, Wo, E) if
    channels_last=True (skips the output transpose)."""
    N, C, H, W = x.shape
    E, Cw, KH, KW = conv_w.shape
    assert Cw == C
    if out_dtype is None:
        out_dtype = x.dtype
    ph, pw = KH // 2, KW // 2
    Ho = (H + 2 * ph - KH) // stride + 1
    Wo = (W + 2 * pw - KW) // stride + 1
    T = KH * KW

    # ---- glue: NHWC + compute-dtype cast FIRST, then tap-last im2col ---------
    # (no transpose of the blown-up slab; the slab itself is compute_dtype).
    xc = jnp.transpose(x, (0, 2, 3, 1)).astype(compute_dtype)          # (N,H,W,C)
    xp = jnp.pad(xc, ((0, 0), (ph, ph), (pw, pw), (0, 0)))
    taps = []
    for kh in range(KH):
        for kw in range(KW):
            taps.append(
                xp[:, kh: kh + stride * (Ho - 1) + 1: stride,
                      kw: kw + stride * (Wo - 1) + 1: stride, :])       # (N,Ho,Wo,C)
    patches = jnp.stack(taps, axis=-1)                                  # (N,Ho,Wo,C,T)
    patches = patches.reshape(N * Ho * Wo, C * T)                       # (M,K) c-major/tap-minor

    # ---- glue: fold eval-mode BatchNorm into the GEMM weight / bias ----------
    scale = bn_gamma / jnp.sqrt(bn_var + eps)                           # (E,)
    w_mat = conv_w.reshape(E, C * T).T * scale[None, :]                 # (K, E)
    bias = ((conv_b - bn_mean) * scale + bn_beta)[None, :]              # (1, E), f32

    M, K = patches.shape
    # ---- pad K and E to multiples of 128 (full MXU depth, unmasked stores) ---
    K_pad = _round_up(K, 128)
    E_pad = _round_up(E, 128)
    w_mat = jnp.pad(w_mat, ((0, K_pad - K), (0, E_pad - E))).astype(compute_dtype)
    bias = jnp.pad(bias, ((0, 0), (0, E_pad - E))).astype(jnp.float32)

    # ---- row-tile size from a VMEM budget (resident weight + 2x patch + 2x out)
    cd_size = np.dtype(compute_dtype).itemsize
    out_size = np.dtype(out_dtype).itemsize
    row_align = {4: 8, 2: 16, 1: 32}.get(cd_size, 8)
    vmem_budget = 24 * 1024 * 1024          # headroom under the 32 MiB scoped limit
    fixed = 2 * K_pad * E_pad * cd_size + 2 * E_pad * 4   # weight (+bias) buffers
    per_row = 2 * K_pad * cd_size + 2 * E_pad * out_size  # patch + output buffers
    tm_cap = max(row_align, (vmem_budget - fixed) // per_row)
    tm_cap = max(row_align, min(1024, (tm_cap // row_align) * row_align))

    n_tiles = max(2, pl.cdiv(M, tm_cap))    # >= 2 and even -> both v7x cores busy
    if n_tiles % 2:
        n_tiles += 1
    tm = _round_up(pl.cdiv(M, n_tiles), row_align)
    M_pad = n_tiles * tm

    patches = jnp.pad(patches, ((0, M_pad - M), (0, K_pad - K)))

    out = pl.pallas_call(
        _gemm_bias_kernel,
        out_shape=jax.ShapeDtypeStruct((M_pad, E_pad), out_dtype),
        grid_spec=pl.GridSpec(
            grid=(n_tiles,),
            in_specs=[
                # streamed patch tile
                _block_spec((tm, K_pad), lambda i: (i, 0), patch_pipeline_mode),
                # folded weight: constant index -> stays VMEM-resident
                _block_spec((K_pad, E_pad), lambda i: (0, 0), weight_pipeline_mode),
                # folded bias (f32)
                _block_spec((1, E_pad), lambda i: (0, 0)),
            ],
            out_specs=pl.BlockSpec((tm, E_pad), lambda i: (i, 0)),
        ),
        compiler_params=pltpu.CompilerParams(
            dimension_semantics=("parallel",),
            vmem_limit_bytes=32 * 1024 * 1024),
    )(patches, w_mat, bias)

    out = out[:M, :E]
    y = out.reshape(N, Ho, Wo, E)
    if not channels_last:
        y = jnp.transpose(y, (0, 3, 1, 2))                              # NCHW (module parity)
    return y, Ho, Wo


def _reference_forward(x, conv_w, conv_b, bn_gamma, bn_beta, bn_mean, bn_var,
                       *, stride=4, eps=1e-5):
    """Pure-JAX reference mirroring the PyTorch forward (conv + eval-mode BN)."""
    ph, pw = conv_w.shape[2] // 2, conv_w.shape[3] // 2
    y = jax.lax.conv_general_dilated(
        x, conv_w, window_strides=(stride, stride),
        padding=((ph, ph), (pw, pw)),
        dimension_numbers=("NCHW", "OIHW", "NCHW"))
    y = y + conv_b[None, :, None, None]
    scale = (bn_gamma / jnp.sqrt(bn_var + eps))[None, :, None, None]
    y = (y - bn_mean[None, :, None, None]) * scale + bn_beta[None, :, None, None]
    return y, y.shape[2], y.shape[3]


if __name__ == "__main__":
    # Small deterministic config: batch=2, in_chans=3, 16x16 input,
    # patch_size=7, stride=4, embed_dim=32  ->  output (2, 32, 4, 4).
    N, C_in, H, W = 2, 3, 16, 16
    embed_dim, patch_size, stride = 32, 7, 4

    key = jax.random.PRNGKey(0)
    k1, k2, k3, k4, k5, k6 = jax.random.split(key, 6)

    # Conv2d init as in the module: normal(0, sqrt(2 / fan_out)), zero bias
    fan_out = patch_size * patch_size * embed_dim
    conv_w = jax.random.normal(k1, (embed_dim, C_in, patch_size, patch_size),
                               dtype=jnp.float32) * (2.0 / fan_out) ** 0.5
    conv_b = jnp.zeros((embed_dim,), dtype=jnp.float32)

    # Synthetic (non-trivial) BatchNorm parameters / running stats
    bn_gamma = 1.0 + 0.1 * jax.random.normal(k2, (embed_dim,), dtype=jnp.float32)
    bn_beta = 0.1 * jax.random.normal(k3, (embed_dim,), dtype=jnp.float32)
    bn_mean = 0.1 * jax.random.normal(k4, (embed_dim,), dtype=jnp.float32)
    bn_var = jnp.abs(jax.random.normal(k5, (embed_dim,), dtype=jnp.float32)) + 0.5

    x = jax.random.normal(k6, (N, C_in, H, W), dtype=jnp.float32)

    y_ref, Ho_ref, Wo_ref = _reference_forward(
        x, conv_w, conv_b, bn_gamma, bn_beta, bn_mean, bn_var, stride=stride)
    y_ref = jax.block_until_ready(y_ref)

    # 1) f32 compute path: tight numerical check of GEMM / BN fold / K,E padding.
    y32, Ho, Wo = overlap_patch_embed(x, conv_w, conv_b, bn_gamma, bn_beta,
                                      bn_mean, bn_var, stride=stride,
                                      compute_dtype=jnp.float32)
    y32 = jax.block_until_ready(y32)
    assert (Ho, Wo) == (Ho_ref, Wo_ref) == (4, 4), (Ho, Wo)
    assert y32.shape == (N, embed_dim, Ho, Wo), y32.shape
    assert jnp.allclose(y32, y_ref, atol=1e-4, rtol=1e-4), (
        float(jnp.max(jnp.abs(y32 - y_ref))))

    # 2) default bf16 compute path (production config): loose tolerance vs f32 ref.
    ybf, Ho2, Wo2 = overlap_patch_embed(x, conv_w, conv_b, bn_gamma, bn_beta,
                                        bn_mean, bn_var, stride=stride)
    ybf = jax.block_until_ready(ybf)
    assert (Ho2, Wo2) == (Ho, Wo)
    assert ybf.shape == (N, embed_dim, Ho, Wo), ybf.shape
    assert jnp.allclose(ybf, y_ref, atol=3e-2, rtol=3e-2), (
        float(jnp.max(jnp.abs(ybf - y_ref))))

    # 3) channels_last path (skips the post-kernel NCHW transpose) matches.
    ycl, _, _ = overlap_patch_embed(x, conv_w, conv_b, bn_gamma, bn_beta,
                                    bn_mean, bn_var, stride=stride,
                                    channels_last=True)
    ycl = jax.block_until_ready(ycl)
    assert ycl.shape == (N, Ho, Wo, embed_dim), ycl.shape
    assert jnp.array_equal(jnp.transpose(ycl, (0, 3, 1, 2)), ybf)

    print("KERNEL_OK")
</pallas_src>

<mosaic_0001>
module attributes {stable_mosaic.version = 11 : i64} {
  func.func @_gemm_bias_kernel(%arg0: i32, %arg1: memref<16x256xf32, #tpu.memory_space<vmem>>, %arg2: memref<256x128xf32, #tpu.memory_space<vmem>>, %arg3: memref<1x128xf32, #tpu.memory_space<vmem>>, %arg4: memref<16x128xf32, #tpu.memory_space<vmem>>) attributes {dimension_semantics = [#tpu.dimension_semantics<parallel>], iteration_bounds = array<i64: 2>, scalar_prefetch = 0 : i64, scratch_operands = 0 : i64, tpu.core_type = #tpu.core_type<tc>, window_params = [{transform_indices = @transform_0, window_bounds = array<i64: 16, 256>}, {pipeline_mode = #tpu.pipeline_mode<synchronous>, transform_indices = @transform_1, window_bounds = array<i64: 256, 128>}, {pipeline_mode = #tpu.pipeline_mode<synchronous>, transform_indices = @transform_2, window_bounds = array<i64: 1, 128>}, {transform_indices = @transform_3, window_bounds = array<i64: 16, 128>}]} {
    %c0 = arith.constant 0 : index
    %c0_0 = arith.constant 0 : index
    %0 = vector.load %arg1[%c0, %c0_0] : memref<16x256xf32, #tpu.memory_space<vmem>>, vector<16x256xf32>
    %c0_1 = arith.constant 0 : index
    %c0_2 = arith.constant 0 : index
    %1 = vector.load %arg2[%c0_1, %c0_2] : memref<256x128xf32, #tpu.memory_space<vmem>>, vector<256x128xf32>
    %cst = arith.constant dense<0.000000e+00> : vector<16x128xf32>
    %2 = tpu.matmul %0, %1, %cst {dimension_numbers = #tpu.dot_dimension_numbers<[1], [0], [0], [1], [0, 0, 1, 1], [], []>} : vector<16x256xf32>, vector<256x128xf32>, vector<16x128xf32> -> vector<16x128xf32>
    %c0_3 = arith.constant 0 : index
    %c0_4 = arith.constant 0 : index
    %3 = vector.load %arg3[%c0_3, %c0_4] : memref<1x128xf32, #tpu.memory_space<vmem>>, vector<1x128xf32>
    %4 = vector.broadcast %3 : vector<1x128xf32> to vector<16x128xf32>
    %5 = arith.addf %2, %4 : vector<16x128xf32>
    %c0_5 = arith.constant 0 : index
    %c0_6 = arith.constant 0 : index
    %6 = vector.load %arg4[%c0_5, %c0_6] : memref<16x128xf32, #tpu.memory_space<vmem>>, vector<16x128xf32>
    tpu.vector_store %arg4[%c0_5, %c0_6], %5 {strides = array<i32>} : memref<16x128xf32, #tpu.memory_space<vmem>>, vector<16x128xf32>,
    return
  }
  func.func @transform_0(%arg0: i32) -> (i32, i32) {
    %c0_i32 = arith.constant 0 : i32
    %c0_i32_0 = arith.constant 0 : i32
    return %arg0, %c0_i32 : i32, i32
  }
  func.func @transform_1(%arg0: i32) -> (i32, i32) {
    %c0_i32 = arith.constant 0 : i32
    %c0_i32_0 = arith.constant 0 : i32
    %c0_i32_1 = arith.constant 0 : i32
    return %c0_i32, %c0_i32_0 : i32, i32
  }
  func.func @transform_2(%arg0: i32) -> (i32, i32) {
    %c0_i32 = arith.constant 0 : i32
    %c0_i32_0 = arith.constant 0 : i32
    %c0_i32_1 = arith.constant 0 : i32
    return %c0_i32, %c0_i32_0 : i32, i32
  }
  func.func @transform_3(%arg0: i32) -> (i32, i32) {
    %c0_i32 = arith.constant 0 : i32
    %c0_i32_0 = arith.constant 0 : i32
    return %arg0, %c0_i32 : i32, i32
  }
}

</mosaic_0001>

<llo_original>
// kernel: tpu_custom_call.1
$region0: #{tpu_custom_call.1}
  #allocation0 [shape = 'u32[]', space=smem, size = 0x4, offset = 0x4, fixed_abs, tag = 'smem constant byte address 0x4 - core index']
  #allocation1 [shape = 'u32[144,128]{1,0:T(1,128)}', space=vmem, size = 0x12000, scoped, tag = 'internal scratch']
  %s0 = inlined_call_operand.hbm [shape: f32[32,256], index: 0, kind: input, shape index: {}]
  %s1 = inlined_call_operand.hbm [shape: f32[256,128], index: 1, kind: input, shape index: {}]
  %s2 = inlined_call_operand.vmem [shape: f32[1,128], index: 2, kind: input, shape index: {}]
  %s3 = inlined_call_operand.hbm [shape: f32[32,128], index: 3, kind: output, shape index: {}]
  %s4 = sld [smem:[#allocation0]]
  $region53: #{tpu_custom_call.1} parent=0
    _
  %s6 = ssub.s32 1, %s4
  %s7 = scalar_select 0, %s6, %s4
  $region1: #{tpu_custom_call.1} parent=0
    #allocation2 [shape = 'u8[32768]{0}', space=vmem, size = 0x8000, scoped, tag = 'input window, operand 0']
    #allocation3 [shape = 's32[2]{0}', space=sflag, size = 0x8, scoped, tag = 'scoped memory for tpu_custom_call.1']
    #allocation4 [shape = 's32[2]{0}', space=sflag, size = 0x8, scoped, tag = 'scoped memory for tpu_custom_call.1']
    #allocation5 [shape = 'u8[131072]{0}', space=vmem, size = 0x20000, scoped, tag = 'input window, operand 1, single buffered']
    #allocation6 [shape = 's32[1]{0}', space=sflag, size = 0x4, scoped, tag = 'scoped memory for tpu_custom_call.1']
    #allocation7 [shape = 'u8[16384]{0}', space=vmem, size = 0x4000, scoped, tag = 'output window, operand 0']
    %8 = vsyncpa [#allocation3], 0
    %s9 = scalar_lea.sflag [#allocation3], 1
    %10 = vsyncpa %s9, 0
    %11 = vsyncpa [#allocation6], 0
    %12 = vsyncpa [#allocation4], 0
    %s13 = scalar_lea.sflag [#allocation4], 1
    %14 = vsyncpa %s13, 0
    loop: start=0, step=1, limit=4
    $region2: #{tpu_custom_call.1} parent=1 // loop_pre_header
      _
    $region3: #{tpu_custom_call.1} parent=1 // loop_header
      %s16 = sphi 0, %s20
      %p17 = scmp.ge.s32.totalorder %s16, 4
      %s26 = sphi 0, %s28
      %s29 = sphi 0, %s26
      %s30 = sphi 0, %s29
      %s46 = sphi 0, %s30
      %s50 = sphi 0, %s50
      %s52 = sphi 0, %s50
      %s53 = sphi 0, %s52
      %s67 = sphi 0, %s53
      %s71 = sphi 0, %s71
      %s73 = sphi 0, %s71
      %s74 = sphi 0, %s73
      %s88 = sphi 0, %s74
      %s94 = sphi 0, %s96
      %s97 = sphi 0, %s94
      %s98 = sphi 0, %s97
      %s114 = sphi 0, %s98
    $region4: #{tpu_custom_call.1} parent=1 // loop_header_branch
      %19 = sbr.rel (%p17) target = $region8
    $region5: #{tpu_custom_call.1} parent=1 // loop_body
      %s21 = ssub.s32 %s16, 1
      %s22 = ssub.s32 %s16, 2
      %s23 = sadd.s32 %s16, 1
      %s24 = ssub.s32 %s16, %s23
      %p25 = scmp.eq.s32.totalorder %s24, 0
      %s27 = sadd.s32 %s26, 1
      %s28 = scalar_select %p25, %s26, %s27
      %p31 = pneg %p25
      %p32 = scmp.eq.s32.totalorder %s16, 1
      %p33 = por %p31, %p32
      %p34 = scmp.ne.s32.totalorder %s26, %s29
      %p35 = scmp.eq.s32.totalorder %s16, 0
      %p36 = por %p34, %p35
      %p37 = scmp.ne.s32.totalorder %s26, %s29
      %p38 = scmp.eq.s32.totalorder %s21, 1
      %p39 = por %p37, %p38
      %p40 = scmp.ne.s32.totalorder %s29, %s30
      %p41 = scmp.eq.s32.totalorder %s21, 0
      %p42 = por %p40, %p41
      %p43 = scmp.ne.s32.totalorder %s29, %s30
      %p44 = scmp.eq.s32.totalorder %s22, 1
      %p45 = por %p43, %p44
      %p47 = scmp.ne.s32.totalorder %s30, %s46
      %p48 = scmp.eq.s32.totalorder %s22, 0
      %p49 = por %p47, %p48
      %s51 = sadd.s32 %s50, 1
      %p54 = scmp.eq.s32.totalorder %s16, 1
      %p55 = scmp.ne.s32.totalorder %s50, %s52
      %p56 = scmp.eq.s32.totalorder %s16, 0
      %p57 = por %p55, %p56
      %p58 = scmp.ne.s32.totalorder %s50, %s52
      %p59 = scmp.eq.s32.totalorder %s21, 1
      %p60 = por %p58, %p59
      %p61 = scmp.ne.s32.totalorder %s52, %s53
      %p62 = scmp.eq.s32.totalorder %s21, 0
      %p63 = por %p61, %p62
      %p64 = scmp.ne.s32.totalorder %s52, %s53
      %p65 = scmp.eq.s32.totalorder %s22, 1
      %p66 = por %p64, %p65
      %p68 = scmp.ne.s32.totalorder %s53, %s67
      %p69 = scmp.eq.s32.totalorder %s22, 0
      %p70 = por %p68, %p69
      %s72 = sadd.s32 %s71, 1
      %p75 = scmp.eq.s32.totalorder %s16, 1
      %p76 = scmp.ne.s32.totalorder %s71, %s73
      %p77 = scmp.eq.s32.totalorder %s16, 0
      %p78 = por %p76, %p77
      %p79 = scmp.ne.s32.totalorder %s71, %s73
      %p80 = scmp.eq.s32.totalorder %s21, 1
      %p81 = por %p79, %p80
      %p82 = scmp.ne.s32.totalorder %s73, %s74
      %p83 = scmp.eq.s32.totalorder %s21, 0
      %p84 = por %p82, %p83
      %p85 = scmp.ne.s32.totalorder %s73, %s74
      %p86 = scmp.eq.s32.totalorder %s22, 1
      %p87 = por %p85, %p86
      %p89 = scmp.ne.s32.totalorder %s74, %s88
      %p90 = scmp.eq.s32.totalorder %s22, 0
      %p91 = por %p89, %p90
      %s92 = ssub.s32 %s16, %s23
      %p93 = scmp.eq.s32.totalorder %s92, 0
      %s95 = sadd.s32 %s94, 1
      %s96 = scalar_select %p93, %s94, %s95
      %p99 = pneg %p93
      %p100 = scmp.eq.s32.totalorder %s16, 1
      %p101 = por %p99, %p100
      %p102 = scmp.ne.s32.totalorder %s94, %s97
      %p103 = scmp.eq.s32.totalorder %s16, 0
      %p104 = por %p102, %p103
      %p105 = scmp.ne.s32.totalorder %s94, %s97
      %p106 = scmp.eq.s32.totalorder %s21, 1
      %p107 = por %p105, %p106
      %p108 = scmp.ne.s32.totalorder %s97, %s98
      %p109 = scmp.eq.s32.totalorder %s21, 0
      %p110 = por %p108, %p109
      %p111 = scmp.ne.s32.totalorder %s97, %s98
      %p112 = scmp.eq.s32.totalorder %s22, 1
      %p113 = por %p111, %p112
      %p115 = scmp.ne.s32.totalorder %s98, %s114
      %p116 = scmp.eq.s32.totalorder %s22, 0
      %p117 = por %p115, %p116
      %p118 = scmp.le.s32.totalorder 1, %s16
      %p119 = scmp.lt.s32.totalorder %s16, 3
      %p120 = pnand %p118, %p119
      %p121 = pneg %p120
      // Predicated region
      $region9: #{tpu_custom_call.1} parent=5 // pred_check
        _
      $region10: #{tpu_custom_call.1} parent=5 // pred_check_branch
        %123 = sbr.rel (%p120) target = $region12
      $region11: #{tpu_custom_call.1} parent=5 // pred_region
        %s124 = ssub.s32 %s16, 1
        // Predicated region
        $region13: #{tpu_custom_call.1} parent=11 // pred_check
          %p125 = pneg %p63
        $region14: #{tpu_custom_call.1} parent=11 // pred_check_branch
          %127 = sbr.rel (%p125) target = $region16
        $region15: #{tpu_custom_call.1} parent=11 // pred_region
          %s129 = ssub.s32 4096, 4096
          %130 = vsyncadd [#allocation6], %s129
          %s131 = sshll.u32 [#allocation5], 4
          %s132 = int_to_ptr.vmem [resolvable:$true] %s131
          %137 = dma.hbm_to_vmem [thread:$0]  %s1, 4096, %s132, [#allocation6], 128, 128, 8
        $region16: #{tpu_custom_call.1} parent=11 // pred_fallthru
          _
        // Predicated region
        $region17: #{tpu_custom_call.1} parent=11 // pred_check
          %p138 = pneg %p84
        $region18: #{tpu_custom_call.1} parent=11 // pred_check_branch
          %140 = sbr.rel (%p138) target = $region20
        $region19: #{tpu_custom_call.1} parent=11 // pred_region
          _
        $region20: #{tpu_custom_call.1} parent=11 // pred_fallthru
          _
      $region12: #{tpu_custom_call.1} parent=5 // pred_fallthru
        _
      %p141 = scmp.lt.s32.totalorder %s16, 2
      // Predicated region
      $region21: #{tpu_custom_call.1} parent=5 // pred_check
        %p142 = pneg %p141
      $region22: #{tpu_custom_call.1} parent=5 // pred_check_branch
        %144 = sbr.rel (%p142) target = $region24
      $region23: #{tpu_custom_call.1} parent=5 // pred_region
        // Predicated region
        $region25: #{tpu_custom_call.1} parent=23 // pred_check
          %p145 = pneg %p36
        $region26: #{tpu_custom_call.1} parent=23 // pred_check_branch
          %147 = sbr.rel (%p145) target = $region28
        $region27: #{tpu_custom_call.1} parent=23 // pred_region
          %s148 = sand.u32 %s26, 1
          %s149 = scalar_lea.sflag [#allocation3], %s148
          %s150 = sand.u32 %s26, 1
          %s151 = smul.addr %s150, 32
          %s152 = scalar_lea.vmem [#allocation2], %s151
          %s153 = smul.u32 2, %s16
          %s155 = ssub.s32 512, 512
          %156 = vsyncadd %s149, %s155
          %s157 = smul.addr %s153, 2
          %s158 = smul.addr %s157, 128
          %s159 = scalar_lea.hbm %s0, %s158
          %s160 = sshll.u32 %s152, 4
          %s161 = int_to_ptr.vmem [resolvable:$true] %s160
          %166 = dma.hbm_to_vmem [thread:$0]  %s159, 512, %s161, %s149, 256, 256, 16
        $region28: #{tpu_custom_call.1} parent=23 // pred_fallthru
          _
      $region24: #{tpu_custom_call.1} parent=5 // pred_fallthru
        _
      %p167 = scmp.le.s32.totalorder 1, %s16
      %p168 = scmp.lt.s32.totalorder %s16, 3
      %p169 = pnand %p167, %p168
      %p170 = pneg %p169
      // Predicated region
      $region29: #{tpu_custom_call.1} parent=5 // pred_check
        _
      $region30: #{tpu_custom_call.1} parent=5 // pred_check_branch
        %172 = sbr.rel (%p169) target = $region32
      $region31: #{tpu_custom_call.1} parent=5 // pred_region
        %s173 = ssub.s32 %s16, 1
        %s174 = sand.u32 %s29, 1
        %s175 = scalar_lea.sflag [#allocation3], %s174
        %s176 = sand.u32 %s29, 1
        %s177 = smul.addr %s176, 32
        %s178 = scalar_lea.vmem [#allocation2], %s177
        // Predicated region
        $region33: #{tpu_custom_call.1} parent=31 // pred_check
          %p179 = pneg %p42
        $region34: #{tpu_custom_call.1} parent=31 // pred_check_branch
          %181 = sbr.rel (%p179) target = $region36
        $region35: #{tpu_custom_call.1} parent=31 // pred_region
          %182 = dma.done %s175, 512
        $region36: #{tpu_custom_call.1} parent=31 // pred_fallthru
          _
        // Predicated region
        $region37: #{tpu_custom_call.1} parent=31 // pred_check
          %p183 = pneg %p63
        $region38: #{tpu_custom_call.1} parent=31 // pred_check_branch
          %185 = sbr.rel (%p183) target = $region40
        $region39: #{tpu_custom_call.1} parent=31 // pred_region
          %186 = dma.done [#allocation6], 4096
        $region40: #{tpu_custom_call.1} parent=31 // pred_fallthru
          _
        %s187 = sand.u32 %s29, 1
        %s188 = scalar_lea.sflag [#allocation3], %s187
        %s189 = sand.u32 %s29, 1
        %s190 = smul.addr %s189, 32
        %s191 = scalar_lea.vmem [#allocation2], %s190
        %p192 = pneg %p42
        %p193 = pneg %p39
        %p194 = pneg %p63
        %p195 = pneg %p60
        %p196 = pneg %p84
        %p197 = pneg %p81
        %p198 = pneg %p110
        %p199 = pneg %p107
        %s200 = sand.u32 %s97, 1
        %s201 = scalar_lea.sflag [#allocation4], %s200
        %s202 = sand.u32 %s97, 1
        %s203 = smul.addr %s202, 16
        %s204 = scalar_lea.vmem [#allocation7], %s203
        %s205 = smul.u32 2, %s21
        %s206 = smul.u32 2, %s21
        %v207 = vld [vmem:[%s178] sm:$0xff]
        %v208 = vld [vmem:[%s178 + $0x8] sm:$0xff]
        %v209 = vld [vmem:[%s178 + $0x10] sm:$0xff]
        %v210 = vld [vmem:[%s178 + $0x18] sm:$0xff]
        %v211 = vld [vmem:[#allocation5] sm:$0xff]
        %v212 = vld [vmem:[#allocation5 + $0x8] sm:$0xff]
        %v213 = vld [vmem:[#allocation5 + $0x10] sm:$0xff]
        %v214 = vld [vmem:[#allocation5 + $0x18] sm:$0xff]
        %v215 = vld [vmem:[#allocation5 + $0x20] sm:$0xff]
        %v216 = vld [vmem:[#allocation5 + $0x28] sm:$0xff]
        %v217 = vld [vmem:[#allocation5 + $0x30] sm:$0xff]
        %v218 = vld [vmem:[#allocation5 + $0x38] sm:$0xff]
        %v219 = vld [vmem:[#allocation5 + $0x40] sm:$0xff]
        %v220 = vld [vmem:[#allocation5 + $0x48] sm:$0xff]
        %v221 = vld [vmem:[#allocation5 + $0x50] sm:$0xff]
        %v222 = vld [vmem:[#allocation5 + $0x58] sm:$0xff]
        %v223 = vld [vmem:[#allocation5 + $0x60] sm:$0xff]
        %v224 = vld [vmem:[#allocation5 + $0x68] sm:$0xff]
        %v225 = vld [vmem:[#allocation5 + $0x70] sm:$0xff]
        %v226 = vld [vmem:[#allocation5 + $0x78] sm:$0xff]
        %v227 = vld [vmem:[#allocation5 + $0x80] sm:$0xff]
        %v228 = vld [vmem:[#allocation5 + $0x88] sm:$0xff]
        %v229 = vld [vmem:[#allocation5 + $0x90] sm:$0xff]
        %v230 = vld [vmem:[#allocation5 + $0x98] sm:$0xff]
        %v231 = vld [vmem:[#allocation5 + $0xa0] sm:$0xff]
        %v232 = vld [vmem:[#allocation5 + $0xa8] sm:$0xff]
        %v233 = vld [vmem:[#allocation5 + $0xb0] sm:$0xff]
        %v234 = vld [vmem:[#allocation5 + $0xb8] sm:$0xff]
        %v235 = vld [vmem:[#allocation5 + $0xc0] sm:$0xff]
        %v236 = vld [vmem:[#allocation5 + $0xc8] sm:$0xff]
        %v237 = vld [vmem:[#allocation5 + $0xd0] sm:$0xff]
        %v238 = vld [vmem:[#allocation5 + $0xd8] sm:$0xff]
        %v239 = vld [vmem:[#allocation5 + $0xe0] sm:$0xff]
        %v240 = vld [vmem:[#allocation5 + $0xe8] sm:$0xff]
        %v241 = vld [vmem:[#allocation5 + $0xf0] sm:$0xff]
        %v242 = vld [vmem:[#allocation5 + $0xf8] sm:$0xff]
        %v243 = vld [vmem:[%s2] sm:$0x1]
        %v245 = vlaneseq
        %v246 = vshrl.u32 %v245, 7
        %v247 = vsub.s32 0, %v246
        %v248 = vrot.slane %v243, %v247
        %250 = vmatprep.subr.mxu0 0.0
        %251 = vmatpush1.msra.mxu0 %v226
        %252 = vmatprep.subr.mxu0 0.0
        %253 = vmatpush1.msra.mxu0 %v225
        %254 = vmatprep.subr.mxu0 0.0
        %255 = vmatpush1.msra.mxu0 %v224
        %256 = vmatprep.subr.mxu0 0.0
        %257 = vmatpush1.msra.mxu0 %v223
        %258 = vmatprep.subr.mxu0 0.0
        %259 = vmatpush1.msra.mxu0 %v222
        %260 = vmatprep.subr.mxu0 0.0
        %261 = vmatpush1.msra.mxu0 %v221
        %262 = vmatprep.subr.mxu0 0.0
        %263 = vmatpush1.msra.mxu0 %v220
        %264 = vmatprep.subr.mxu0 0.0
        %265 = vmatpush1.msra.mxu0 %v219
        %266 = vmatprep.subr.mxu0 0.0
        %267 = vmatpush1.msra.mxu0 %v218
        %268 = vmatprep.subr.mxu0 0.0
        %269 = vmatpush1.msra.mxu0 %v217
        %270 = vmatprep.subr.mxu0 0.0
        %271 = vmatpush1.msra.mxu0 %v216
        %272 = vmatprep.subr.mxu0 0.0
        %273 = vmatpush1.msra.mxu0 %v215
        %274 = vmatprep.subr.mxu0 0.0
        %275 = vmatpush1.msra.mxu0 %v214
        %276 = vmatprep.subr.mxu0 0.0
        %277 = vmatpush1.msra.mxu0 %v213
        %278 = vmatprep.subr.mxu0 0.0
        %279 = vmatpush1.msra.mxu0 %v212
        %280 = vmatprep.subr.mxu0 0.0
        %281 = vmatpush1.msra.mxu0 %v211
        %282 = vmatprep.subr.mxu0 0.0
        %283 = vmatpush2.msra.mxu0 %v242
        %284 = vmatprep.subr.mxu0 0.0
        %285 = vmatpush2.msra.mxu0 %v241
        %286 = vmatprep.subr.mxu0 0.0
        %287 = vmatpush2.msra.mxu0 %v240
        %288 = vmatprep.subr.mxu0 0.0
        %289 = vmatpush2.msra.mxu0 %v239
        %290 = vmatprep.subr.mxu0 0.0
        %291 = vmatpush2.msra.mxu0 %v238
        %292 = vmatprep.subr.mxu0 0.0
        %293 = vmatpush2.msra.mxu0 %v237
        %294 = vmatprep.subr.mxu0 0.0
        %295 = vmatpush2.msra.mxu0 %v236
        %296 = vmatprep.subr.mxu0 0.0
        %297 = vmatpush2.msra.mxu0 %v235
        %298 = vmatprep.subr.mxu0 0.0
        %299 = vmatpush2.msra.mxu0 %v234
        %300 = vmatprep.subr.mxu0 0.0
        %301 = vmatpush2.msra.mxu0 %v233
        %302 = vmatprep.subr.mxu0 0.0
        %303 = vmatpush2.msra.mxu0 %v232
        %304 = vmatprep.subr.mxu0 0.0
        %305 = vmatpush2.msra.mxu0 %v231
        %306 = vmatprep.subr.mxu0 0.0
        %307 = vmatpush2.msra.mxu0 %v230
        %308 = vmatprep.subr.mxu0 0.0
        %309 = vmatpush2.msra.mxu0 %v229
        %310 = vmatprep.subr.mxu0 0.0
        %311 = vmatpush2.msra.mxu0 %v228
        %312 = vmatprep.subr.mxu0 0.0
        %313 = vmatpush2.msra.mxu0 %v227
        %314 = vmatprep.mubr.f32.mxu0 %v208
        %315 = vmatmul.mubr.f32.gmra.mxu0 %v207
        %v316 = vpop.f32.mrf.mxu0
        %v317 = vadd.f32 %v248, %v316
        %v318 = vpop.f32.mrf.mxu0
        %319 = vmatprep.mubr.f32.mxu0 %v210
        %320 = vmatmul.mubr.f32.gmra.mxu0 %v209
        %v321 = vpop.f32.mrf.mxu0
        %v322 = vadd.f32 %v248, %v321
        %v323 = vpop.f32.mrf.mxu0
        %324 = vdwg.mxu0
        %325 = vst [vmem:[%s204] sm:$0xff] %v317
        %326 = vst [vmem:[%s204 + $0x8] sm:$0xff] %v322
        %s327 = sand.u32 %s97, 1
        %s328 = scalar_lea.sflag [#allocation4], %s327
        %s329 = sand.u32 %s97, 1
        %s330 = smul.addr %s329, 16
        %s331 = scalar_lea.vmem [#allocation7], %s330
        // Predicated region
        $region41: #{tpu_custom_call.1} parent=31 // pred_check
          %p332 = pneg %p107
        $region42: #{tpu_custom_call.1} parent=31 // pred_check_branch
          %334 = sbr.rel (%p332) target = $region44
        $region43: #{tpu_custom_call.1} parent=31 // pred_region
          %s335 = smul.u32 2, %s21
          %s337 = ssub.s32 256, 256
          %338 = vsyncadd %s328, %s337
          %s339 = smul.addr %s335, 128
          %s340 = scalar_lea.hbm %s3, %s339
          %s341 = sshll.u32 %s331, 4
          %s342 = int_to_ptr.vmem [resolvable:$true] %s341
          %347 = dma.vmem_to_hbm [thread:$0]  %s342, 256, %s340, %s328, 128, 128, 8
        $region44: #{tpu_custom_call.1} parent=31 // pred_fallthru
          _
      $region32: #{tpu_custom_call.1} parent=5 // pred_fallthru
        _
      %p348 = scmp.le.s32.totalorder 2, %s16
      // Predicated region
      $region45: #{tpu_custom_call.1} parent=5 // pred_check
        %p349 = pneg %p348
      $region46: #{tpu_custom_call.1} parent=5 // pred_check_branch
        %351 = sbr.rel (%p349) target = $region48
      $region47: #{tpu_custom_call.1} parent=5 // pred_region
        %s352 = ssub.s32 %s16, 2
        // Predicated region
        $region49: #{tpu_custom_call.1} parent=47 // pred_check
          %p353 = pneg %p113
        $region50: #{tpu_custom_call.1} parent=47 // pred_check_branch
          %355 = sbr.rel (%p353) target = $region52
        $region51: #{tpu_custom_call.1} parent=47 // pred_region
          %s356 = sand.u32 %s98, 1
          %s357 = scalar_lea.sflag [#allocation4], %s356
          %s358 = sand.u32 %s98, 1
          %s359 = smul.addr %s358, 16
          %s360 = scalar_lea.vmem [#allocation7], %s359
          %361 = dma.done %s357, 256
        $region52: #{tpu_custom_call.1} parent=47 // pred_fallthru
          _
      $region48: #{tpu_custom_call.1} parent=5 // pred_fallthru
        _
    $region6: #{tpu_custom_call.1} parent=1 // loop_footer
      %s20 = sadd.s32 1, %s16
    $region7: #{tpu_custom_call.1} parent=1 // loop_footer_branch
      %15 = sbr.rel target = $region3
    $region8: #{tpu_custom_call.1} parent=1 // loop_exit
      _
    %362 = vsyncpa [#allocation3], 1
    %s363 = scalar_lea.sflag [#allocation3], 1
    %364 = vsyncpa %s363, 1
    %365 = vsyncpa [#allocation6], 1
    %366 = vsyncpa [#allocation4], 1
    %s367 = scalar_lea.sflag [#allocation4], 1
    %368 = vsyncpa %s367, 1

</llo_original>
